<compile_context>
chip_gen: v7x
topology: tpu7x:2x2x1
jax: 0.10.0
libtpu: 0.0.40
codegen_flags: <defaults>
</compile_context>

<pallas_src>
import functools

import jax
import jax.numpy as jnp
from jax.experimental import pallas as pl
from jax.experimental.pallas import tpu as pltpu


def se_block_kernel(x_ref, w1t_ref, b1_ref, w2t_ref, b2_ref, o_ref, *, inv_hw, chunk):
    tb, c, hw = x_ref.shape

    # --- Squeeze: global average pool, f32-accumulated in lane chunks so a
    # bf16 tile never needs a full-tile f32 copy (keeps VMEM headroom for TB).
    pooled = jnp.zeros((tb, c), jnp.float32)
    for start in range(0, hw, chunk):
        stop = min(start + chunk, hw)
        xc = x_ref[:, :, start:stop]
        pooled = pooled + jnp.sum(xc.astype(jnp.float32), axis=-1)
    pooled = pooled * inv_hw                                            # (TB, C) f32

    # --- Excitation: fc1 (1x1 conv) + ReLU, fc2 (1x1 conv) + sigmoid, in f32.
    h = jnp.dot(pooled, w1t_ref[...],
                preferred_element_type=jnp.float32) + b1_ref[...]       # (TB, Hd)
    h = jnp.maximum(h, 0.0)
    s = jnp.dot(h, w2t_ref[...],
                preferred_element_type=jnp.float32) + b2_ref[...]       # (TB, C)
    s = jax.nn.sigmoid(s).astype(x_ref.dtype)[:, :, None]               # (TB, C, 1)

    # --- Scale: per-(batch, channel) gate broadcast over the spatial lanes,
    # streamed chunk-by-chunk (bounds vreg pressure; stores stay lane-aligned).
    for start in range(0, hw, chunk):
        stop = min(start + chunk, hw)
        o_ref[:, :, start:stop] = x_ref[:, :, start:stop] * s


def _vmem_capacity_bytes():
    try:
        return int(pltpu.get_tpu_info().vmem_capacity_bytes)
    except Exception:
        return 64 * 1024 * 1024  # conservative default (v7x per-TC VMEM)


def se_block(x, w1, b1, w2, b2):
    """x: (B, C, H, W); w1: (Hd, C); b1: (Hd,); w2: (C, Hd); b2: (C,).

    Returns (B, C, H, W) in x.dtype, matching the PyTorch SEBlock forward.
    """
    B, C, H, W = x.shape
    Hd = w1.shape[0]
    HW = H * W
    dtype = x.dtype
    itemsize = jnp.dtype(dtype).itemsize

    # No pad / crop: (B, C, H, W) -> (B, C, HW) is a free contiguous reshape.
    x2 = x.reshape(B, C, HW)

    # --- VMEM / tile budgeting (generation aware). ---
    vmem_cap = _vmem_capacity_bytes()
    vmem_limit = min((vmem_cap * 3) // 4, 96 * 1024 * 1024)  # 48 MiB v7x, 96 MiB v5e/v6e
    tile_target = max(2 * 1024 * 1024, vmem_limit // 8)      # ~6 MiB v7x, ~12 MiB v5e/v6e

    bytes_per_batch = C * HW * itemsize
    TB = int(max(1, min(B, tile_target // max(bytes_per_batch, 1))))
    # Keep >= 2 batch blocks when possible so the "parallel" axis can shard
    # across both TensorCores on v7x (harmless on single-TC v5e/v6e).
    if B >= 2:
        TB = min(TB, -(-B // 2))
    grid_b = pl.cdiv(B, TB)

    # Lane-chunk for the in-kernel pool/scale loops: cap the f32 pooling
    # transient at ~2 MiB and keep the chunk a multiple of 128 lanes.
    chunk = (2 * 1024 * 1024) // max(TB * C * 4, 1)
    chunk = max(128, (chunk // 128) * 128)
    chunk = int(min(chunk, HW))

    # Feasibility: double-buffered in + out tiles + pooling transient + slack.
    tile_bytes = TB * bytes_per_batch
    required = 4 * tile_bytes + TB * C * chunk * 4 + 2 * 1024 * 1024
    if required > vmem_limit:
        vmem_limit = min(required, max(vmem_cap - 4 * 1024 * 1024, vmem_limit))
    if required > vmem_limit:
        # TODO(synk): fall back to an inner spatial pipeline (pltpu.emit_pipeline
        # over HW chunks: pooled accumulator sweep + second scaling sweep) when a
        # single (1, C, HW) tile cannot fit VMEM.
        raise ValueError(
            f"SEBlock tile (C={C}, HW={HW}, dtype={dtype}) needs ~{required} bytes "
            f"of VMEM, exceeding the {vmem_limit}-byte budget on this TPU.")

    # Gate parameters stay tiny and VMEM-resident, in f32.
    w1t = w1.T.astype(jnp.float32)               # (C, Hd)
    w2t = w2.T.astype(jnp.float32)               # (Hd, C)
    b1r = b1.reshape(1, Hd).astype(jnp.float32)  # (1, Hd)
    b2r = b2.reshape(1, C).astype(jnp.float32)   # (1, C)

    kernel = functools.partial(se_block_kernel, inv_hw=1.0 / float(HW), chunk=chunk)

    cost = pl.CostEstimate(
        flops=int(2 * B * C * HW + 4 * B * C * Hd),
        transcendentals=int(B * C),
        bytes_accessed=int(2 * B * C * HW * itemsize),
    )

    out = pl.pallas_call(
        kernel,
        out_shape=jax.ShapeDtypeStruct((B, C, HW), dtype),
        grid_spec=pltpu.PrefetchScalarGridSpec(
            num_scalar_prefetch=0,
            grid=(grid_b,),
            in_specs=[
                pl.BlockSpec((TB, C, HW), lambda b: (b, 0, 0)),  # x tile
                pl.BlockSpec((C, Hd), lambda b: (0, 0)),         # fc1 weight^T
                pl.BlockSpec((1, Hd), lambda b: (0, 0)),         # fc1 bias
                pl.BlockSpec((Hd, C), lambda b: (0, 0)),         # fc2 weight^T
                pl.BlockSpec((1, C), lambda b: (0, 0)),          # fc2 bias
            ],
            out_specs=pl.BlockSpec((TB, C, HW), lambda b: (b, 0, 0)),
        ),
        compiler_params=pltpu.CompilerParams(
            dimension_semantics=("parallel",),
            vmem_limit_bytes=int(vmem_limit),
        ),
        cost_estimate=cost,
    )(x2, w1t, b1r, w2t, b2r)

    return out.reshape(B, C, H, W)


def se_block_ref(x, w1, b1, w2, b2):
    """Plain-JAX reference mirroring the PyTorch forward."""
    pooled = jnp.mean(x.astype(jnp.float32), axis=(2, 3))          # (B, C)
    h = jax.nn.relu(pooled @ w1.T.astype(jnp.float32) + b1)        # (B, Hd)
    s = jax.nn.sigmoid(h @ w2.T.astype(jnp.float32) + b2)          # (B, C)
    return (x * s.astype(x.dtype)[:, :, None, None]).astype(x.dtype)


if __name__ == "__main__":
    B, C, H, W = 2, 4, 16, 16
    hidden = 8

    key = jax.random.PRNGKey(0)
    kx, kw1, kb1, kw2, kb2 = jax.random.split(key, 5)

    x = jax.random.normal(kx, (B, C, H, W), dtype=jnp.float32)

    # Conv2d 1x1 kernels collapsed to matrices:
    # fc1: Conv2d(C, hidden, 1) -> weight (hidden, C), bias (hidden,)
    # fc2: Conv2d(hidden, C, 1) -> weight (C, hidden), bias (C,)
    lim1 = 1.0 / jnp.sqrt(jnp.float32(C))
    lim2 = 1.0 / jnp.sqrt(jnp.float32(hidden))
    w1 = jax.random.uniform(kw1, (hidden, C), jnp.float32, -lim1, lim1)
    b1 = jax.random.uniform(kb1, (hidden,), jnp.float32, -lim1, lim1)
    w2 = jax.random.uniform(kw2, (C, hidden), jnp.float32, -lim2, lim2)
    b2 = jax.random.uniform(kb2, (C,), jnp.float32, -lim2, lim2)

    out = se_block(x, w1, b1, w2, b2)
    out = jax.block_until_ready(out)

    ref = jax.block_until_ready(se_block_ref(x, w1, b1, w2, b2))
    assert out.shape == (B, C, H, W)
    assert out.dtype == x.dtype
    assert jnp.allclose(out, ref, atol=1e-5, rtol=1e-5)

    print("KERNEL_OK")
</pallas_src>

<mosaic_0001>
module attributes {stable_mosaic.version = 11 : i64} {
  func.func @se_block_kernel(%arg0: i32, %arg1: memref<1x4x256xf32, #tpu.memory_space<vmem>>, %arg2: memref<4x8xf32, #tpu.memory_space<vmem>>, %arg3: memref<1x8xf32, #tpu.memory_space<vmem>>, %arg4: memref<8x4xf32, #tpu.memory_space<vmem>>, %arg5: memref<1x4xf32, #tpu.memory_space<vmem>>, %arg6: memref<1x4x256xf32, #tpu.memory_space<vmem>>) attributes {dimension_semantics = [#tpu.dimension_semantics<parallel>], iteration_bounds = array<i64: 2>, scalar_prefetch = 0 : i64, scratch_operands = 0 : i64, tpu.core_type = #tpu.core_type<tc>, window_params = [{transform_indices = @transform_0, window_bounds = array<i64: 1, 4, 256>}, {pipeline_mode = #tpu.pipeline_mode<synchronous>, transform_indices = @transform_1, window_bounds = array<i64: 4, 8>}, {pipeline_mode = #tpu.pipeline_mode<synchronous>, transform_indices = @transform_2, window_bounds = array<i64: 1, 8>}, {pipeline_mode = #tpu.pipeline_mode<synchronous>, transform_indices = @transform_3, window_bounds = array<i64: 8, 4>}, {pipeline_mode = #tpu.pipeline_mode<synchronous>, transform_indices = @transform_4, window_bounds = array<i64: 1, 4>}, {transform_indices = @transform_5, window_bounds = array<i64: 1, 4, 256>}]} {
    %cst = arith.constant 0.000000e+00 : f32
    %0 = vector.broadcast %cst : f32 to vector<1x4xf32>
    %c0 = arith.constant 0 : index
    %c0_0 = arith.constant 0 : index
    %c0_1 = arith.constant 0 : index
    %1 = vector.load %arg1[%c0, %c0_0, %c0_1] : memref<1x4x256xf32, #tpu.memory_space<vmem>>, vector<1x4x256xf32>
    %cst_2 = arith.constant dense<0.000000e+00> : vector<1x4xf32>
    %2 = vector.multi_reduction <add>, %1, %cst_2 [2] : vector<1x4x256xf32> to vector<1x4xf32>
    %3 = arith.addf %0, %2 : vector<1x4xf32>
    %cst_3 = arith.constant 3.906250e-03 : f32
    %4 = vector.broadcast %cst_3 : f32 to vector<1x4xf32>
    %5 = arith.mulf %3, %4 : vector<1x4xf32>
    %c0_4 = arith.constant 0 : index
    %c0_5 = arith.constant 0 : index
    %6 = vector.load %arg2[%c0_4, %c0_5] : memref<4x8xf32, #tpu.memory_space<vmem>>, vector<4x8xf32>
    %cst_6 = arith.constant dense<0.000000e+00> : vector<1x8xf32>
    %7 = tpu.matmul %5, %6, %cst_6 {dimension_numbers = #tpu.dot_dimension_numbers<[1], [0], [0], [1], [0, 0, 1, 1], [], []>} : vector<1x4xf32>, vector<4x8xf32>, vector<1x8xf32> -> vector<1x8xf32>
    %c0_7 = arith.constant 0 : index
    %c0_8 = arith.constant 0 : index
    %8 = vector.load %arg3[%c0_7, %c0_8] : memref<1x8xf32, #tpu.memory_space<vmem>>, vector<1x8xf32>
    %9 = arith.addf %7, %8 : vector<1x8xf32>
    %cst_9 = arith.constant 0.000000e+00 : f32
    %10 = vector.broadcast %cst_9 : f32 to vector<1x8xf32>
    %11 = arith.maximumf %9, %10 : vector<1x8xf32>
    %c0_10 = arith.constant 0 : index
    %c0_11 = arith.constant 0 : index
    %12 = vector.load %arg4[%c0_10, %c0_11] : memref<8x4xf32, #tpu.memory_space<vmem>>, vector<8x4xf32>
    %cst_12 = arith.constant dense<0.000000e+00> : vector<1x4xf32>
    %13 = tpu.matmul %11, %12, %cst_12 {dimension_numbers = #tpu.dot_dimension_numbers<[1], [0], [0], [1], [0, 0, 1, 1], [], []>} : vector<1x8xf32>, vector<8x4xf32>, vector<1x4xf32> -> vector<1x4xf32>
    %c0_13 = arith.constant 0 : index
    %c0_14 = arith.constant 0 : index
    %14 = vector.load %arg5[%c0_13, %c0_14] : memref<1x4xf32, #tpu.memory_space<vmem>>, vector<1x4xf32>
    %15 = arith.addf %13, %14 : vector<1x4xf32>
    %16 = arith.negf %15 : vector<1x4xf32>
    %17 = math.exp %16 : vector<1x4xf32>
    %cst_15 = arith.constant 1.000000e+00 : f32
    %18 = vector.broadcast %cst_15 : f32 to vector<1x4xf32>
    %19 = arith.addf %18, %17 : vector<1x4xf32>
    %20 = arith.divf %18, %19 : vector<1x4xf32>
    %21 = vector.shape_cast %20 : vector<1x4xf32> to vector<1x4x1xf32>
    %c0_16 = arith.constant 0 : index
    %c0_17 = arith.constant 0 : index
    %c0_18 = arith.constant 0 : index
    %22 = vector.load %arg1[%c0_16, %c0_17, %c0_18] : memref<1x4x256xf32, #tpu.memory_space<vmem>>, vector<1x4x256xf32>
    %23 = vector.broadcast %21 : vector<1x4x1xf32> to vector<1x4x256xf32>
    %24 = arith.mulf %22, %23 : vector<1x4x256xf32>
    %c0_19 = arith.constant 0 : index
    %c0_20 = arith.constant 0 : index
    %c0_21 = arith.constant 0 : index
    %25 = vector.load %arg6[%c0_19, %c0_20, %c0_21] : memref<1x4x256xf32, #tpu.memory_space<vmem>>, vector<1x4x256xf32>
    tpu.vector_store %arg6[%c0_19, %c0_20, %c0_21], %24 {strides = array<i32>} : memref<1x4x256xf32, #tpu.memory_space<vmem>>, vector<1x4x256xf32>,
    return
  }
  func.func @transform_0(%arg0: i32) -> (i32, i32, i32) {
    %c0_i32 = arith.constant 0 : i32
    %c0_i32_0 = arith.constant 0 : i32
    %c0_i32_1 = arith.constant 0 : i32
    return %arg0, %c0_i32, %c0_i32_0 : i32, i32, i32
  }
  func.func @transform_1(%arg0: i32) -> (i32, i32) {
    %c0_i32 = arith.constant 0 : i32
    %c0_i32_0 = arith.constant 0 : i32
    %c0_i32_1 = arith.constant 0 : i32
    return %c0_i32, %c0_i32_0 : i32, i32
  }
  func.func @transform_2(%arg0: i32) -> (i32, i32) {
    %c0_i32 = arith.constant 0 : i32
    %c0_i32_0 = arith.constant 0 : i32
    %c0_i32_1 = arith.constant 0 : i32
    return %c0_i32, %c0_i32_0 : i32, i32
  }
  func.func @transform_3(%arg0: i32) -> (i32, i32) {
    %c0_i32 = arith.constant 0 : i32
    %c0_i32_0 = arith.constant 0 : i32
    %c0_i32_1 = arith.constant 0 : i32
    return %c0_i32, %c0_i32_0 : i32, i32
  }
  func.func @transform_4(%arg0: i32) -> (i32, i32) {
    %c0_i32 = arith.constant 0 : i32
    %c0_i32_0 = arith.constant 0 : i32
    %c0_i32_1 = arith.constant 0 : i32
    return %c0_i32, %c0_i32_0 : i32, i32
  }
  func.func @transform_5(%arg0: i32) -> (i32, i32, i32) {
    %c0_i32 = arith.constant 0 : i32
    %c0_i32_0 = arith.constant 0 : i32
    %c0_i32_1 = arith.constant 0 : i32
    return %arg0, %c0_i32, %c0_i32_0 : i32, i32, i32
  }
}

</mosaic_0001>

<llo_original>
// kernel: tpu_custom_call.1
$region0: #{tpu_custom_call.1}
  #allocation0 [shape = 'u32[]', space=smem, size = 0x4, offset = 0x4, fixed_abs, tag = 'smem constant byte address 0x4 - core index']
  #allocation1 [shape = 'u32[144,128]{1,0:T(1,128)}', space=vmem, size = 0x12000, scoped, tag = 'internal scratch']
  %s0 = inlined_call_operand.hbm [shape: f32[2,4,256], index: 0, kind: input, shape index: {}]
  %s1 = inlined_call_operand.vmem [shape: f32[4,8], index: 1, kind: input, shape index: {}]
  %s2 = inlined_call_operand.vmem [shape: f32[1,8], index: 2, kind: input, shape index: {}]
  %s3 = inlined_call_operand.vmem [shape: f32[8,4], index: 3, kind: input, shape index: {}]
  %s4 = inlined_call_operand.vmem [shape: f32[1,4], index: 4, kind: input, shape index: {}]
  %s5 = inlined_call_operand.hbm [shape: f32[2,4,256], index: 5, kind: output, shape index: {}]
  %s6 = sld [smem:[#allocation0]]
  $region57: #{tpu_custom_call.1} parent=0
    _
  %s8 = ssub.s32 1, %s6
  %s9 = scalar_select 0, %s8, %s6
  $region1: #{tpu_custom_call.1} parent=0
    #allocation2 [shape = 'u8[8192]{0}', space=vmem, size = 0x2000, scoped, tag = 'input window, operand 0']
    #allocation3 [shape = 's32[2]{0}', space=sflag, size = 0x8, scoped, tag = 'scoped memory for tpu_custom_call.1']
    #allocation4 [shape = 's32[2]{0}', space=sflag, size = 0x8, scoped, tag = 'scoped memory for tpu_custom_call.1']
    #allocation5 [shape = 'u8[8192]{0}', space=vmem, size = 0x2000, scoped, tag = 'output window, operand 0']
    %10 = vsyncpa [#allocation3], 0
    %s11 = scalar_lea.sflag [#allocation3], 1
    %12 = vsyncpa %s11, 0
    %13 = vsyncpa [#allocation4], 0
    %s14 = scalar_lea.sflag [#allocation4], 1
    %15 = vsyncpa %s14, 0
    loop: start=0, step=1, limit=4
    $region2: #{tpu_custom_call.1} parent=1 // loop_pre_header
      _
    $region3: #{tpu_custom_call.1} parent=1 // loop_header
      %s17 = sphi 0, %s21
      %p18 = scmp.ge.s32.totalorder %s17, 4
      %s27 = sphi 0, %s29
      %s30 = sphi 0, %s27
      %s31 = sphi 0, %s30
      %s47 = sphi 0, %s31
      %s51 = sphi 0, %s51
      %s53 = sphi 0, %s51
      %s54 = sphi 0, %s53
      %s68 = sphi 0, %s54
      %s72 = sphi 0, %s72
      %s74 = sphi 0, %s72
      %s75 = sphi 0, %s74
      %s89 = sphi 0, %s75
      %s93 = sphi 0, %s93
      %s95 = sphi 0, %s93
      %s96 = sphi 0, %s95
      %s110 = sphi 0, %s96
      %s114 = sphi 0, %s114
      %s116 = sphi 0, %s114
      %s117 = sphi 0, %s116
      %s131 = sphi 0, %s117
      %s137 = sphi 0, %s139
      %s140 = sphi 0, %s137
      %s141 = sphi 0, %s140
      %s157 = sphi 0, %s141
    $region4: #{tpu_custom_call.1} parent=1 // loop_header_branch
      %20 = sbr.rel (%p18) target = $region8
    $region5: #{tpu_custom_call.1} parent=1 // loop_body
      %s22 = ssub.s32 %s17, 1
      %s23 = ssub.s32 %s17, 2
      %s24 = sadd.s32 %s17, 1
      %s25 = ssub.s32 %s17, %s24
      %p26 = scmp.eq.s32.totalorder %s25, 0
      %s28 = sadd.s32 %s27, 1
      %s29 = scalar_select %p26, %s27, %s28
      %p32 = pneg %p26
      %p33 = scmp.eq.s32.totalorder %s17, 1
      %p34 = por %p32, %p33
      %p35 = scmp.ne.s32.totalorder %s27, %s30
      %p36 = scmp.eq.s32.totalorder %s17, 0
      %p37 = por %p35, %p36
      %p38 = scmp.ne.s32.totalorder %s27, %s30
      %p39 = scmp.eq.s32.totalorder %s22, 1
      %p40 = por %p38, %p39
      %p41 = scmp.ne.s32.totalorder %s30, %s31
      %p42 = scmp.eq.s32.totalorder %s22, 0
      %p43 = por %p41, %p42
      %p44 = scmp.ne.s32.totalorder %s30, %s31
      %p45 = scmp.eq.s32.totalorder %s23, 1
      %p46 = por %p44, %p45
      %p48 = scmp.ne.s32.totalorder %s31, %s47
      %p49 = scmp.eq.s32.totalorder %s23, 0
      %p50 = por %p48, %p49
      %s52 = sadd.s32 %s51, 1
      %p55 = scmp.eq.s32.totalorder %s17, 1
      %p56 = scmp.ne.s32.totalorder %s51, %s53
      %p57 = scmp.eq.s32.totalorder %s17, 0
      %p58 = por %p56, %p57
      %p59 = scmp.ne.s32.totalorder %s51, %s53
      %p60 = scmp.eq.s32.totalorder %s22, 1
      %p61 = por %p59, %p60
      %p62 = scmp.ne.s32.totalorder %s53, %s54
      %p63 = scmp.eq.s32.totalorder %s22, 0
      %p64 = por %p62, %p63
      %p65 = scmp.ne.s32.totalorder %s53, %s54
      %p66 = scmp.eq.s32.totalorder %s23, 1
      %p67 = por %p65, %p66
      %p69 = scmp.ne.s32.totalorder %s54, %s68
      %p70 = scmp.eq.s32.totalorder %s23, 0
      %p71 = por %p69, %p70
      %s73 = sadd.s32 %s72, 1
      %p76 = scmp.eq.s32.totalorder %s17, 1
      %p77 = scmp.ne.s32.totalorder %s72, %s74
      %p78 = scmp.eq.s32.totalorder %s17, 0
      %p79 = por %p77, %p78
      %p80 = scmp.ne.s32.totalorder %s72, %s74
      %p81 = scmp.eq.s32.totalorder %s22, 1
      %p82 = por %p80, %p81
      %p83 = scmp.ne.s32.totalorder %s74, %s75
      %p84 = scmp.eq.s32.totalorder %s22, 0
      %p85 = por %p83, %p84
      %p86 = scmp.ne.s32.totalorder %s74, %s75
      %p87 = scmp.eq.s32.totalorder %s23, 1
      %p88 = por %p86, %p87
      %p90 = scmp.ne.s32.totalorder %s75, %s89
      %p91 = scmp.eq.s32.totalorder %s23, 0
      %p92 = por %p90, %p91
      %s94 = sadd.s32 %s93, 1
      %p97 = scmp.eq.s32.totalorder %s17, 1
      %p98 = scmp.ne.s32.totalorder %s93, %s95
      %p99 = scmp.eq.s32.totalorder %s17, 0
      %p100 = por %p98, %p99
      %p101 = scmp.ne.s32.totalorder %s93, %s95
      %p102 = scmp.eq.s32.totalorder %s22, 1
      %p103 = por %p101, %p102
      %p104 = scmp.ne.s32.totalorder %s95, %s96
      %p105 = scmp.eq.s32.totalorder %s22, 0
      %p106 = por %p104, %p105
      %p107 = scmp.ne.s32.totalorder %s95, %s96
      %p108 = scmp.eq.s32.totalorder %s23, 1
      %p109 = por %p107, %p108
      %p111 = scmp.ne.s32.totalorder %s96, %s110
      %p112 = scmp.eq.s32.totalorder %s23, 0
      %p113 = por %p111, %p112
      %s115 = sadd.s32 %s114, 1
      %p118 = scmp.eq.s32.totalorder %s17, 1
      %p119 = scmp.ne.s32.totalorder %s114, %s116
      %p120 = scmp.eq.s32.totalorder %s17, 0
      %p121 = por %p119, %p120
      %p122 = scmp.ne.s32.totalorder %s114, %s116
      %p123 = scmp.eq.s32.totalorder %s22, 1
      %p124 = por %p122, %p123
      %p125 = scmp.ne.s32.totalorder %s116, %s117
      %p126 = scmp.eq.s32.totalorder %s22, 0
      %p127 = por %p125, %p126
      %p128 = scmp.ne.s32.totalorder %s116, %s117
      %p129 = scmp.eq.s32.totalorder %s23, 1
      %p130 = por %p128, %p129
      %p132 = scmp.ne.s32.totalorder %s117, %s131
      %p133 = scmp.eq.s32.totalorder %s23, 0
      %p134 = por %p132, %p133
      %s135 = ssub.s32 %s17, %s24
      %p136 = scmp.eq.s32.totalorder %s135, 0
      %s138 = sadd.s32 %s137, 1
      %s139 = scalar_select %p136, %s137, %s138
      %p142 = pneg %p136
      %p143 = scmp.eq.s32.totalorder %s17, 1
      %p144 = por %p142, %p143
      %p145 = scmp.ne.s32.totalorder %s137, %s140
      %p146 = scmp.eq.s32.totalorder %s17, 0
      %p147 = por %p145, %p146
      %p148 = scmp.ne.s32.totalorder %s137, %s140
      %p149 = scmp.eq.s32.totalorder %s22, 1
      %p150 = por %p148, %p149
      %p151 = scmp.ne.s32.totalorder %s140, %s141
      %p152 = scmp.eq.s32.totalorder %s22, 0
      %p153 = por %p151, %p152
      %p154 = scmp.ne.s32.totalorder %s140, %s141
      %p155 = scmp.eq.s32.totalorder %s23, 1
      %p156 = por %p154, %p155
      %p158 = scmp.ne.s32.totalorder %s141, %s157
      %p159 = scmp.eq.s32.totalorder %s23, 0
      %p160 = por %p158, %p159
      %p161 = scmp.le.s32.totalorder 1, %s17
      %p162 = scmp.lt.s32.totalorder %s17, 3
      %p163 = pnand %p161, %p162
      %p164 = pneg %p163
      // Predicated region
      $region9: #{tpu_custom_call.1} parent=5 // pred_check
        _
      $region10: #{tpu_custom_call.1} parent=5 // pred_check_branch
        %166 = sbr.rel (%p163) target = $region12
      $region11: #{tpu_custom_call.1} parent=5 // pred_region
        %s167 = ssub.s32 %s17, 1
        // Predicated region
        $region13: #{tpu_custom_call.1} parent=11 // pred_check
          %p168 = pneg %p64
        $region14: #{tpu_custom_call.1} parent=11 // pred_check_branch
          %170 = sbr.rel (%p168) target = $region16
        $region15: #{tpu_custom_call.1} parent=11 // pred_region
          _
        $region16: #{tpu_custom_call.1} parent=11 // pred_fallthru
          _
        // Predicated region
        $region17: #{tpu_custom_call.1} parent=11 // pred_check
          %p171 = pneg %p85
        $region18: #{tpu_custom_call.1} parent=11 // pred_check_branch
          %173 = sbr.rel (%p171) target = $region20
        $region19: #{tpu_custom_call.1} parent=11 // pred_region
          _
        $region20: #{tpu_custom_call.1} parent=11 // pred_fallthru
          _
        // Predicated region
        $region21: #{tpu_custom_call.1} parent=11 // pred_check
          %p174 = pneg %p106
        $region22: #{tpu_custom_call.1} parent=11 // pred_check_branch
          %176 = sbr.rel (%p174) target = $region24
        $region23: #{tpu_custom_call.1} parent=11 // pred_region
          _
        $region24: #{tpu_custom_call.1} parent=11 // pred_fallthru
          _
        // Predicated region
        $region25: #{tpu_custom_call.1} parent=11 // pred_check
          %p177 = pneg %p127
        $region26: #{tpu_custom_call.1} parent=11 // pred_check_branch
          %179 = sbr.rel (%p177) target = $region28
        $region27: #{tpu_custom_call.1} parent=11 // pred_region
          _
        $region28: #{tpu_custom_call.1} parent=11 // pred_fallthru
          _
      $region12: #{tpu_custom_call.1} parent=5 // pred_fallthru
        _
      %p180 = scmp.lt.s32.totalorder %s17, 2
      // Predicated region
      $region29: #{tpu_custom_call.1} parent=5 // pred_check
        %p181 = pneg %p180
      $region30: #{tpu_custom_call.1} parent=5 // pred_check_branch
        %183 = sbr.rel (%p181) target = $region32
      $region31: #{tpu_custom_call.1} parent=5 // pred_region
        // Predicated region
        $region33: #{tpu_custom_call.1} parent=31 // pred_check
          %p184 = pneg %p37
        $region34: #{tpu_custom_call.1} parent=31 // pred_check_branch
          %186 = sbr.rel (%p184) target = $region36
        $region35: #{tpu_custom_call.1} parent=31 // pred_region
          %s187 = sand.u32 %s27, 1
          %s188 = scalar_lea.sflag [#allocation3], %s187
          %s189 = sand.u32 %s27, 1
          %s190 = smul.addr %s189, 8
          %s191 = scalar_lea.vmem [#allocation2], %s190
          %s193 = ssub.s32 128, 128
          %194 = vsyncadd %s188, %s193
          %s195 = smul.addr %s17, 2
          %s196 = smul.addr %s195, 64
          %s197 = scalar_lea.hbm %s0, %s196
          %s199 = sshll.u32 %s191, 4
          %s200 = int_to_ptr.vmem [resolvable:$true] %s199
          %202 = dma.hbm_to_vmem [thread:$0]  %s197, 128, %s200, %s188
        $region36: #{tpu_custom_call.1} parent=31 // pred_fallthru
          _
      $region32: #{tpu_custom_call.1} parent=5 // pred_fallthru
        _
      %p203 = scmp.le.s32.totalorder 1, %s17
      %p204 = scmp.lt.s32.totalorder %s17, 3
      %p205 = pnand %p203, %p204
      %p206 = pneg %p205
      // Predicated region
      $region37: #{tpu_custom_call.1} parent=5 // pred_check
        _
      $region38: #{tpu_custom_call.1} parent=5 // pred_check_branch
        %208 = sbr.rel (%p205) target = $region40
      $region39: #{tpu_custom_call.1} parent=5 // pred_region
        %s209 = ssub.s32 %s17, 1
        %s210 = sand.u32 %s30, 1
        %s211 = scalar_lea.sflag [#allocation3], %s210
        %s212 = sand.u32 %s30, 1
        %s213 = smul.addr %s212, 8
        %s214 = scalar_lea.vmem [#allocation2], %s213
        // Predicated region
        $region41: #{tpu_custom_call.1} parent=39 // pred_check
          %p215 = pneg %p43
        $region42: #{tpu_custom_call.1} parent=39 // pred_check_branch
          %217 = sbr.rel (%p215) target = $region44
        $region43: #{tpu_custom_call.1} parent=39 // pred_region
          %218 = dma.done %s211, 128
        $region44: #{tpu_custom_call.1} parent=39 // pred_fallthru
          _
        %s219 = sand.u32 %s30, 1
        %s220 = scalar_lea.sflag [#allocation3], %s219
        %s221 = sand.u32 %s30, 1
        %s222 = smul.addr %s221, 8
        %s223 = scalar_lea.vmem [#allocation2], %s222
        %p224 = pneg %p43
        %p225 = pneg %p40
        %p226 = pneg %p64
        %p227 = pneg %p61
        %p228 = pneg %p85
        %p229 = pneg %p82
        %p230 = pneg %p106
        %p231 = pneg %p103
        %p232 = pneg %p127
        %p233 = pneg %p124
        %p234 = pneg %p153
        %p235 = pneg %p150
        %s236 = sand.u32 %s140, 1
        %s237 = scalar_lea.sflag [#allocation4], %s236
        %s238 = sand.u32 %s140, 1
        %s239 = smul.addr %s238, 8
        %s240 = scalar_lea.vmem [#allocation5], %s239
        %v241 = vld [vmem:[%s214] sm:$0xff]
        %v243 = vcombine.high %v241, %v241
        %vm245 = vcmask 1043456
        %v246 = vsel %vm245, %v241, 0.0
        %v247 = vsel %vm245, %v243, 0.0
        %v248 = vadd.f32 %v246, %v247
        %249 = vadd.xlane.f32.xlu0 %v248
        %v250 = vpop.xlane.xlu0 %249
        %v251 = vadd.f32 %v250, 0.0
        %v252 = vmul.f32 %v251, 0.00390625
        %v253 = vld [vmem:[%s1] sm:$0xf]
        %v254 = vld [vmem:[%s2] sm:$0x1]
        %v256 = vlaneseq
        %v257 = vand.u32 %v256, 127
        %v258 = vlaneseq
        %v259 = vshrl.u32 %v258, 7
        %v260 = vsub.s32 %v257, %v259
        %v261 = vrot.slane %v252, %v260
        %vm262 = vcmask 31744
        %v263 = vsel %vm262, %v261, 0
        %v266 = vsel %vm245, %v253, 0
        %268 = vmatprep.subr.mxu0 0.0
        %269 = vmatpush1.msra.mxu0 %v266
        %270 = vmatprep.subr.mxu0 0.0
        %271 = vmatpush1.msra.mxu0 0.0
        %272 = vmatprep.subr.mxu0 0.0
        %273 = vmatpush1.msra.mxu0 0.0
        %274 = vmatprep.subr.mxu0 0.0
        %275 = vmatpush1.msra.mxu0 0.0
        %276 = vmatprep.subr.mxu0 0.0
        %277 = vmatpush1.msra.mxu0 0.0
        %278 = vmatprep.subr.mxu0 0.0
        %279 = vmatpush1.msra.mxu0 0.0
        %280 = vmatprep.subr.mxu0 0.0
        %281 = vmatpush1.msra.mxu0 0.0
        %282 = vmatprep.subr.mxu0 0.0
        %283 = vmatpush1.msra.mxu0 0.0
        %284 = vmatprep.subr.mxu0 0.0
        %285 = vmatpush1.msra.mxu0 0.0
        %286 = vmatprep.subr.mxu0 0.0
        %287 = vmatpush1.msra.mxu0 0.0
        %288 = vmatprep.subr.mxu0 0.0
        %289 = vmatpush1.msra.mxu0 0.0
        %290 = vmatprep.subr.mxu0 0.0
        %291 = vmatpush1.msra.mxu0 0.0
        %292 = vmatprep.subr.mxu0 0.0
        %293 = vmatpush1.msra.mxu0 0.0
        %294 = vmatprep.subr.mxu0 0.0
        %295 = vmatpush1.msra.mxu0 0.0
        %296 = vmatprep.subr.mxu0 0.0
        %297 = vmatpush1.msra.mxu0 0.0
        %298 = vmatprep.subr.mxu0 0.0
        %299 = vmatpush1.msra.mxu0 0.0
        %300 = vmatprep.subr.mxu0 0.0
        %301 = vmatpush1.msra.mxu0 0.0
        %302 = vmatprep.subr.mxu0 0.0
        %303 = vmatpush1.msra.mxu0 0.0
        %304 = vmatprep.subr.mxu0 0.0
        %305 = vmatpush1.msra.mxu0 0.0
        %306 = vmatprep.subr.mxu0 0.0
        %307 = vmatpush1.msra.mxu0 0.0
        %308 = vmatprep.subr.mxu0 0.0
        %309 = vmatpush1.msra.mxu0 0.0
        %310 = vmatprep.subr.mxu0 0.0
        %311 = vmatpush1.msra.mxu0 0.0
        %312 = vmatprep.subr.mxu0 0.0
        %313 = vmatpush1.msra.mxu0 0.0
        %314 = vmatprep.subr.mxu0 0.0
        %315 = vmatpush1.msra.mxu0 0.0
        %316 = vmatprep.subr.mxu0 0.0
        %317 = vmatpush1.msra.mxu0 0.0
        %318 = vmatprep.subr.mxu0 0.0
        %319 = vmatpush1.msra.mxu0 0.0
        %320 = vmatprep.subr.mxu0 0.0
        %321 = vmatpush1.msra.mxu0 0.0
        %322 = vmatprep.subr.mxu0 0.0
        %323 = vmatpush1.msra.mxu0 0.0
        %324 = vmatprep.subr.mxu0 0.0
        %325 = vmatpush1.msra.mxu0 0.0
        %326 = vmatprep.subr.mxu0 0.0
        %327 = vmatpush1.msra.mxu0 0.0
        %328 = vmatprep.subr.mxu0 0.0
        %329 = vmatpush1.msra.mxu0 0.0
        %330 = vmatprep.subr.mxu0 0.0
        %331 = vmatpush1.msra.mxu0 0.0
        %332 = vmatprep.mubr.f32.mxu0 0.0
        %333 = vmatmul.mubr.f32.gmra.mrb[0].mxu0 %v263
        %v334 = vpop.f32.mrb[0].mxu0
        %v335 = vadd.f32 %v254, %v334
        %v336 = vpop.f32.mrb[0].mxu0
        %337 = vdwg.mxu0
        %v338 = vmax.f32 %v335, 0.0
        %v339 = vld [vmem:[%s3] sm:$0xff]
        %v340 = vld [vmem:[%s4] sm:$0x1]
        %vm341 = vcmask 64512
        %v343 = vsel %vm341, %v338, 0
        %345 = vmatprep.subr.mxu0 0.0
        %346 = vmatpush1.msra.mxu0 %v339
        %347 = vmatprep.subr.mxu0 0.0
        %348 = vmatpush1.msra.mxu0 0.0
        %349 = vmatprep.subr.mxu0 0.0
        %350 = vmatpush1.msra.mxu0 0.0
        %351 = vmatprep.subr.mxu0 0.0
        %352 = vmatpush1.msra.mxu0 0.0
        %353 = vmatprep.subr.mxu0 0.0
        %354 = vmatpush1.msra.mxu0 0.0
        %355 = vmatprep.subr.mxu0 0.0
        %356 = vmatpush1.msra.mxu0 0.0
        %357 = vmatprep.subr.mxu0 0.0
        %358 = vmatpush1.msra.mxu0 0.0
        %359 = vmatprep.subr.mxu0 0.0
        %360 = vmatpush1.msra.mxu0 0.0
        %361 = vmatprep.subr.mxu0 0.0
        %362 = vmatpush1.msra.mxu0 0.0
        %363 = vmatprep.subr.mxu0 0.0
        %364 = vmatpush1.msra.mxu0 0.0
        %365 = vmatprep.subr.mxu0 0.0
        %366 = vmatpush1.msra.mxu0 0.0
        %367 = vmatprep.subr.mxu0 0.0
        %368 = vmatpush1.msra.mxu0 0.0
        %369 = vmatprep.subr.mxu0 0.0
        %370 = vmatpush1.msra.mxu0 0.0
        %371 = vmatprep.subr.mxu0 0.0
        %372 = vmatpush1.msra.mxu0 0.0
        %373 = vmatprep.subr.mxu0 0.0
        %374 = vmatpush1.msra.mxu0 0.0
        %375 = vmatprep.subr.mxu0 0.0
        %376 = vmatpush1.msra.mxu0 0.0
        %377 = vmatprep.subr.mxu0 0.0
        %378 = vmatpush1.msra.mxu0 0.0
        %379 = vmatprep.subr.mxu0 0.0
        %380 = vmatpush1.msra.mxu0 0.0
        %381 = vmatprep.subr.mxu0 0.0
        %382 = vmatpush1.msra.mxu0 0.0
        %383 = vmatprep.subr.mxu0 0.0
        %384 = vmatpush1.msra.mxu0 0.0
        %385 = vmatprep.subr.mxu0 0.0
        %386 = vmatpush1.msra.mxu0 0.0
        %387 = vmatprep.subr.mxu0 0.0
        %388 = vmatpush1.msra.mxu0 0.0
        %389 = vmatprep.subr.mxu0 0.0
        %390 = vmatpush1.msra.mxu0 0.0
        %391 = vmatprep.subr.mxu0 0.0
        %392 = vmatpush1.msra.mxu0 0.0
        %393 = vmatprep.subr.mxu0 0.0
        %394 = vmatpush1.msra.mxu0 0.0
        %395 = vmatprep.subr.mxu0 0.0
        %396 = vmatpush1.msra.mxu0 0.0
        %397 = vmatprep.subr.mxu0 0.0
        %398 = vmatpush1.msra.mxu0 0.0
        %399 = vmatprep.subr.mxu0 0.0
        %400 = vmatpush1.msra.mxu0 0.0
        %401 = vmatprep.subr.mxu0 0.0
        %402 = vmatpush1.msra.mxu0 0.0
        %403 = vmatprep.subr.mxu0 0.0
        %404 = vmatpush1.msra.mxu0 0.0
        %405 = vmatprep.subr.mxu0 0.0
        %406 = vmatpush1.msra.mxu0 0.0
        %407 = vmatprep.subr.mxu0 0.0
        %408 = vmatpush1.msra.mxu0 0.0
        %409 = vmatprep.mubr.f32.mxu0 0.0
        %410 = vmatmul.mubr.f32.gmra.mrb[0].mxu0 %v343
        %v411 = vpop.f32.mrb[0].mxu0
        %v412 = vadd.f32 %v340, %v411
        %v413 = vpop.f32.mrb[0].mxu0
        %414 = vdwg.mxu0
        %v415 = vxor.u32 %v412, 2147483648
        %v416 = vmul.f32 %v415, 1.442695
        %v417 = vpow.pop %v416
        %v418 = vadd.f32 %v417, 1.0
        %v419 = vrcp.pop %v418
        %v420 = vmul.f32 1.0, %v419
        %v421 = vlaneseq
        %v422 = vshrl.u32 %v421, 7
        %v423 = vsub.s32 0, %v422
        %v424 = vrot.slane %v420, %v423
        %426 = vbcast.lane.b32.xlu0 %v424, 256
        %v427 = vpop.permute.xlu0 %426
        %v430 = vunpack.c.l.s4 839922192
        %v431 = vunpack.c.0.s8 %v430
        %v432 = vlaneseq
        %v433 = vshrl.u32 %v432, 7
        %v434 = vsub.s32 %v431, %v433
        %v435 = vrot.slane %v427, %v434
        %v437 = vmul.f32 %v241, %v435
        %438 = vst [vmem:[%s240] sm:$0xff] %v437
        %s439 = sand.u32 %s140, 1
        %s440 = scalar_lea.sflag [#allocation4], %s439
        %s441 = sand.u32 %s140, 1
        %s442 = smul.addr %s441, 8
        %s443 = scalar_lea.vmem [#allocation5], %s442
        // Predicated region
        $region45: #{tpu_custom_call.1} parent=39 // pred_check
          %p444 = pneg %p150
        $region46: #{tpu_custom_call.1} parent=39 // pred_check_branch
          %446 = sbr.rel (%p444) target = $region48
        $region47: #{tpu_custom_call.1} parent=39 // pred_region
          %s448 = ssub.s32 128, 128
          %449 = vsyncadd %s440, %s448
          %s450 = smul.addr %s22, 2
          %s451 = smul.addr %s450, 64
          %s452 = scalar_lea.hbm %s5, %s451
          %s454 = sshll.u32 %s443, 4
          %s455 = int_to_ptr.vmem [resolvable:$true] %s454
          %457 = dma.vmem_to_hbm [thread:$0]  %s455, 128, %s452, %s440
        $region48: #{tpu_custom_call.1} parent=39 // pred_fallthru
          _
      $region40: #{tpu_custom_call.1} parent=5 // pred_fallthru
        _
      %p458 = scmp.le.s32.totalorder 2, %s17
      // Predicated region
      $region49: #{tpu_custom_call.1} parent=5 // pred_check
        %p459 = pneg %p458
      $region50: #{tpu_custom_call.1} parent=5 // pred_check_branch
        %461 = sbr.rel (%p459) target = $region52
      $region51: #{tpu_custom_call.1} parent=5 // pred_region
        %s462 = ssub.s32 %s17, 2
        // Predicated region
        $region53: #{tpu_custom_call.1} parent=51 // pred_check
          %p463 = pneg %p156
        $region54: #{tpu_custom_call.1} parent=51 // pred_check_branch
          %465 = sbr.rel (%p463) target = $region56
        $region55: #{tpu_custom_call.1} parent=51 // pred_region
          %s466 = sand.u32 %s141, 1
          %s467 = scalar_lea.sflag [#allocation4], %s466
          %s468 = sand.u32 %s141, 1
          %s469 = smul.addr %s468, 8
          %s470 = scalar_lea.vmem [#allocation5], %s469
          %471 = dma.done %s467, 128
        $region56: #{tpu_custom_call.1} parent=51 // pred_fallthru
          _
      $region52: #{tpu_custom_call.1} parent=5 // pred_fallthru
        _
    $region6: #{tpu_custom_call.1} parent=1 // loop_footer
      %s21 = sadd.s32 1, %s17
    $region7: #{tpu_custom_call.1} parent=1 // loop_footer_branch
      %16 = sbr.rel target = $region3
    $region8: #{tpu_custom_call.1} parent=1 // loop_exit
      _
    %472 = vsyncpa [#allocation3], 1
    %s473 = scalar_lea.sflag [#allocation3], 1
    %474 = vsyncpa %s473, 1
    %475 = vsyncpa [#allocation4], 1
    %s476 = scalar_lea.sflag [#allocation4], 1
    %477 = vsyncpa %s476, 1

</llo_original>
